<compile_context>
chip_gen: v6e
topology: v6e:2x2x1
jax: 0.10.0
libtpu: 0.0.40
codegen_flags: <defaults>
</compile_context>

<pallas_src>
import jax
import jax.numpy as jnp
from jax.experimental import pallas as pl
from jax.experimental.pallas import tpu as pltpu

LATENT_SIZE = 16
HIDDEN_SIZE = 128
OUTPUT_SIZE = 28 * 28          # 784
OUTPUT_PAD = 7 * 128           # 896 = next multiple of 128


def _round_up(n, m):
    return ((n + m - 1) // m) * m


def decoder_kernel(x_ref, w1_ref, b1_ref, w2_ref, b2_ref, o_ref):
    # Linear1 + ReLU  (bf16 weights upcast to f32; f32 accumulation on the MXU)
    x = x_ref[...]
    h = jnp.dot(x, w1_ref[...].astype(jnp.float32),
                preferred_element_type=jnp.float32)
    h = jnp.maximum(h + b1_ref[...], 0.0)          # b1 [1,H] broadcasts over batch
    # Linear2 + sigmoid
    y = jnp.dot(h, w2_ref[...].astype(jnp.float32),
                preferred_element_type=jnp.float32)
    y = y + b2_ref[...]                            # b2 [1,OUT_PAD]
    o_ref[...] = jax.nn.sigmoid(y).astype(o_ref.dtype)


def decoder_forward(x, w1, b1, w2, b2, *, tb=256):
    """x: [B, latent] f32 -> [B, 784] f32.

    w1: [latent, hidden] bf16, b1: [1, hidden] f32,
    w2: [hidden, 784]    bf16, b2: [1, 784]    f32.
    """
    B = x.shape[0]
    tb = min(tb, _round_up(B, 8))          # batch tile (multiple of 8 sublanes)
    b_pad = _round_up(B, tb)

    # Pad batch to a multiple of the tile and the output/weight lane dim to 896.
    xp = jnp.pad(x, ((0, b_pad - B), (0, 0))) if b_pad != B else x
    w2p = jnp.pad(w2, ((0, 0), (0, OUTPUT_PAD - OUTPUT_SIZE)))
    b2p = jnp.pad(b2, ((0, 0), (0, OUTPUT_PAD - OUTPUT_SIZE)))

    grid = (b_pad // tb,)

    # VMEM budget: double-buffered x/out tiles + resident weights + headroom,
    # capped well under v7x's 64 MiB physical VMEM.
    x_blk = tb * LATENT_SIZE * 4
    out_blk = tb * OUTPUT_PAD * 4
    w_bytes = (LATENT_SIZE * HIDDEN_SIZE + HIDDEN_SIZE * OUTPUT_PAD) * 2  # bf16
    bias_bytes = (HIDDEN_SIZE + OUTPUT_PAD) * 4
    vmem_bytes = min(32 << 20,
                     2 * (x_blk + out_blk) + w_bytes + bias_bytes + (8 << 20))

    out = pl.pallas_call(
        decoder_kernel,
        out_shape=jax.ShapeDtypeStruct((b_pad, OUTPUT_PAD), jnp.float32),
        grid=grid,
        in_specs=[
            pl.BlockSpec((tb, LATENT_SIZE), lambda i: (i, 0)),          # x tile
            pl.BlockSpec((LATENT_SIZE, HIDDEN_SIZE), lambda i: (0, 0)),  # w1 resident
            pl.BlockSpec((1, HIDDEN_SIZE), lambda i: (0, 0)),            # b1 resident
            pl.BlockSpec((HIDDEN_SIZE, OUTPUT_PAD), lambda i: (0, 0)),   # w2 resident
            pl.BlockSpec((1, OUTPUT_PAD), lambda i: (0, 0)),             # b2 resident
        ],
        out_specs=pl.BlockSpec((tb, OUTPUT_PAD), lambda i: (i, 0)),
        compiler_params=pltpu.CompilerParams(
            dimension_semantics=("parallel",),   # shard batch tiles across TCs (v7x)
            vmem_limit_bytes=vmem_bytes,
        ),
    )(xp, w1, b1, w2p, b2p)

    return out[:B, :OUTPUT_SIZE]


def init_params(key):
    """PyTorch nn.Linear-style init: uniform(-1/sqrt(fan_in), 1/sqrt(fan_in)).
    Weights stored [in, out] and kept in bf16 (halves HBM->VMEM DMA); biases f32."""
    k1, k2, k3, k4 = jax.random.split(key, 4)
    bound1 = 1.0 / (LATENT_SIZE ** 0.5)
    bound2 = 1.0 / (HIDDEN_SIZE ** 0.5)
    w1 = jax.random.uniform(k1, (LATENT_SIZE, HIDDEN_SIZE), jnp.float32,
                            minval=-bound1, maxval=bound1).astype(jnp.bfloat16)
    b1 = jax.random.uniform(k2, (1, HIDDEN_SIZE), jnp.float32,
                            minval=-bound1, maxval=bound1)
    w2 = jax.random.uniform(k3, (HIDDEN_SIZE, OUTPUT_SIZE), jnp.float32,
                            minval=-bound2, maxval=bound2).astype(jnp.bfloat16)
    b2 = jax.random.uniform(k4, (1, OUTPUT_SIZE), jnp.float32,
                            minval=-bound2, maxval=bound2)
    return w1, b1, w2, b2


def reference_forward(x, w1, b1, w2, b2):
    w1f = w1.astype(jnp.float32)
    w2f = w2.astype(jnp.float32)
    h = jnp.maximum(x @ w1f + b1, 0.0)
    return jax.nn.sigmoid(h @ w2f + b2)


if __name__ == "__main__":
    key = jax.random.PRNGKey(0)
    kx, kp = jax.random.split(key)

    w1, b1, w2, b2 = init_params(kp)

    # Small batch (single grid step, tile == batch).
    B = 8
    x = jax.random.normal(kx, (B, LATENT_SIZE), dtype=jnp.float32)
    out = jax.block_until_ready(decoder_forward(x, w1, b1, w2, b2))
    ref = reference_forward(x, w1, b1, w2, b2)
    assert out.shape == (B, OUTPUT_SIZE), out.shape
    assert jnp.allclose(out, ref, atol=1e-5, rtol=1e-5), "mismatch vs JAX reference (B=8)"

    # Non-multiple batch: exercises batch padding, grid > 1, resident weights.
    B2 = 300
    x2 = jax.random.normal(jax.random.PRNGKey(1), (B2, LATENT_SIZE), dtype=jnp.float32)
    out2 = jax.block_until_ready(decoder_forward(x2, w1, b1, w2, b2))
    ref2 = reference_forward(x2, w1, b1, w2, b2)
    assert out2.shape == (B2, OUTPUT_SIZE), out2.shape
    assert jnp.allclose(out2, ref2, atol=1e-5, rtol=1e-5), "mismatch vs JAX reference (B=300)"

    print("KERNEL_OK")
</pallas_src>

<mosaic_0001>
module attributes {stable_mosaic.version = 11 : i64} {
  func.func @decoder_kernel(%arg0: i32, %arg1: memref<8x16xf32, #tpu.memory_space<vmem>>, %arg2: memref<16x128xbf16, #tpu.memory_space<vmem>>, %arg3: memref<1x128xf32, #tpu.memory_space<vmem>>, %arg4: memref<128x896xbf16, #tpu.memory_space<vmem>>, %arg5: memref<1x896xf32, #tpu.memory_space<vmem>>, %arg6: memref<8x896xf32, #tpu.memory_space<vmem>>) attributes {dimension_semantics = [#tpu.dimension_semantics<parallel>], iteration_bounds = array<i64: 1>, scalar_prefetch = 0 : i64, scratch_operands = 0 : i64, tpu.core_type = #tpu.core_type<tc>, window_params = [{transform_indices = @transform_0, window_bounds = array<i64: 8, 16>}, {pipeline_mode = #tpu.pipeline_mode<synchronous>, transform_indices = @transform_1, window_bounds = array<i64: 16, 128>}, {pipeline_mode = #tpu.pipeline_mode<synchronous>, transform_indices = @transform_2, window_bounds = array<i64: 1, 128>}, {pipeline_mode = #tpu.pipeline_mode<synchronous>, transform_indices = @transform_3, window_bounds = array<i64: 128, 896>}, {pipeline_mode = #tpu.pipeline_mode<synchronous>, transform_indices = @transform_4, window_bounds = array<i64: 1, 896>}, {transform_indices = @transform_5, window_bounds = array<i64: 8, 896>}]} {
    %c0 = arith.constant 0 : index
    %c0_0 = arith.constant 0 : index
    %0 = vector.load %arg1[%c0, %c0_0] : memref<8x16xf32, #tpu.memory_space<vmem>>, vector<8x16xf32>
    %c0_1 = arith.constant 0 : index
    %c0_2 = arith.constant 0 : index
    %1 = vector.load %arg2[%c0_1, %c0_2] : memref<16x128xbf16, #tpu.memory_space<vmem>>, vector<16x128xbf16>
    %2 = arith.extf %1 : vector<16x128xbf16> to vector<16x128xf32>
    %cst = arith.constant dense<0.000000e+00> : vector<8x128xf32>
    %3 = tpu.matmul %0, %2, %cst {dimension_numbers = #tpu.dot_dimension_numbers<[1], [0], [0], [1], [0, 0, 1, 1], [], []>} : vector<8x16xf32>, vector<16x128xf32>, vector<8x128xf32> -> vector<8x128xf32>
    %c0_3 = arith.constant 0 : index
    %c0_4 = arith.constant 0 : index
    %4 = vector.load %arg3[%c0_3, %c0_4] : memref<1x128xf32, #tpu.memory_space<vmem>>, vector<1x128xf32>
    %5 = vector.broadcast %4 : vector<1x128xf32> to vector<8x128xf32>
    %6 = arith.addf %3, %5 : vector<8x128xf32>
    %cst_5 = arith.constant 0.000000e+00 : f32
    %7 = vector.broadcast %cst_5 : f32 to vector<8x128xf32>
    %8 = arith.maximumf %6, %7 : vector<8x128xf32>
    %c0_6 = arith.constant 0 : index
    %c0_7 = arith.constant 0 : index
    %9 = vector.load %arg4[%c0_6, %c0_7] : memref<128x896xbf16, #tpu.memory_space<vmem>>, vector<128x896xbf16>
    %10 = arith.extf %9 : vector<128x896xbf16> to vector<128x896xf32>
    %cst_8 = arith.constant dense<0.000000e+00> : vector<8x896xf32>
    %11 = tpu.matmul %8, %10, %cst_8 {dimension_numbers = #tpu.dot_dimension_numbers<[1], [0], [0], [1], [0, 0, 1, 1], [], []>} : vector<8x128xf32>, vector<128x896xf32>, vector<8x896xf32> -> vector<8x896xf32>
    %c0_9 = arith.constant 0 : index
    %c0_10 = arith.constant 0 : index
    %12 = vector.load %arg5[%c0_9, %c0_10] : memref<1x896xf32, #tpu.memory_space<vmem>>, vector<1x896xf32>
    %13 = vector.broadcast %12 : vector<1x896xf32> to vector<8x896xf32>
    %14 = arith.addf %11, %13 : vector<8x896xf32>
    %15 = arith.negf %14 : vector<8x896xf32>
    %16 = math.exp %15 : vector<8x896xf32>
    %cst_11 = arith.constant 1.000000e+00 : f32
    %17 = vector.broadcast %cst_11 : f32 to vector<8x896xf32>
    %18 = arith.addf %17, %16 : vector<8x896xf32>
    %19 = arith.divf %17, %18 : vector<8x896xf32>
    %c0_12 = arith.constant 0 : index
    %c0_13 = arith.constant 0 : index
    %20 = vector.load %arg6[%c0_12, %c0_13] : memref<8x896xf32, #tpu.memory_space<vmem>>, vector<8x896xf32>
    tpu.vector_store %arg6[%c0_12, %c0_13], %19 {strides = array<i32>} : memref<8x896xf32, #tpu.memory_space<vmem>>, vector<8x896xf32>,
    return
  }
  func.func @transform_0(%arg0: i32) -> (i32, i32) {
    %c0_i32 = arith.constant 0 : i32
    %c0_i32_0 = arith.constant 0 : i32
    return %arg0, %c0_i32 : i32, i32
  }
  func.func @transform_1(%arg0: i32) -> (i32, i32) {
    %c0_i32 = arith.constant 0 : i32
    %c0_i32_0 = arith.constant 0 : i32
    %c0_i32_1 = arith.constant 0 : i32
    return %c0_i32, %c0_i32_0 : i32, i32
  }
  func.func @transform_2(%arg0: i32) -> (i32, i32) {
    %c0_i32 = arith.constant 0 : i32
    %c0_i32_0 = arith.constant 0 : i32
    %c0_i32_1 = arith.constant 0 : i32
    return %c0_i32, %c0_i32_0 : i32, i32
  }
  func.func @transform_3(%arg0: i32) -> (i32, i32) {
    %c0_i32 = arith.constant 0 : i32
    %c0_i32_0 = arith.constant 0 : i32
    %c0_i32_1 = arith.constant 0 : i32
    return %c0_i32, %c0_i32_0 : i32, i32
  }
  func.func @transform_4(%arg0: i32) -> (i32, i32) {
    %c0_i32 = arith.constant 0 : i32
    %c0_i32_0 = arith.constant 0 : i32
    %c0_i32_1 = arith.constant 0 : i32
    return %c0_i32, %c0_i32_0 : i32, i32
  }
  func.func @transform_5(%arg0: i32) -> (i32, i32) {
    %c0_i32 = arith.constant 0 : i32
    %c0_i32_0 = arith.constant 0 : i32
    return %arg0, %c0_i32 : i32, i32
  }
}

</mosaic_0001>

<llo_original>
// kernel: tpu_custom_call.1
$region0: #{tpu_custom_call.1}
  #allocation0 [shape = 'u32[]', space=smem, size = 0x4, offset = 0x4, fixed_abs, tag = 'smem constant byte address 0x4 - core index']
  #allocation1 [shape = 'u32[144,128]{1,0:T(1,128)}', space=vmem, size = 0x12000, scoped, tag = 'internal scratch']
  %s0 = inlined_call_operand.hbm [shape: f32[8,16], index: 0, kind: input, shape index: {}]
  %s1 = inlined_call_operand.hbm [shape: bf16[16,128], index: 1, kind: input, shape index: {}]
  %s2 = inlined_call_operand.hbm [shape: f32[1,128], index: 2, kind: input, shape index: {}]
  %s3 = inlined_call_operand.hbm [shape: bf16[128,896], index: 3, kind: input, shape index: {}]
  %s4 = inlined_call_operand.vmem [shape: f32[1,896], index: 4, kind: input, shape index: {}]
  %s5 = inlined_call_operand.hbm [shape: f32[8,896], index: 5, kind: output, shape index: {}]
  %s6 = sld [smem:[#allocation0]]
  $region46: #{tpu_custom_call.1} parent=0
    _
  %s8 = ssub.s32 1, %s6
  %s9 = scalar_select 0, %s8, %s6
  $region1: #{tpu_custom_call.1} parent=0
    #allocation2 [shape = 'u8[4096]{0}', space=vmem, size = 0x1000, scoped, tag = 'input window, operand 0, single buffered']
    #allocation3 [shape = 's32[1]{0}', space=sflag, size = 0x4, scoped, tag = 'scoped memory for tpu_custom_call.1']
    #allocation4 [shape = 's32[1]{0}', space=sflag, size = 0x4, scoped, tag = 'scoped memory for tpu_custom_call.1']
    #allocation5 [shape = 'u8[4096]{0}', space=vmem, size = 0x1000, scoped, tag = 'input window, operand 1, single buffered']
    #allocation6 [shape = 's32[1]{0}', space=sflag, size = 0x4, scoped, tag = 'scoped memory for tpu_custom_call.1']
    #allocation7 [shape = 'u8[512]{0}', space=vmem, size = 0x400, scoped, tag = 'input window, operand 2, single buffered']
    #allocation8 [shape = 'u8[229376]{0}', space=vmem, size = 0x38000, scoped, tag = 'input window, operand 3, single buffered']
    #allocation9 [shape = 's32[1]{0}', space=sflag, size = 0x4, scoped, tag = 'scoped memory for tpu_custom_call.1']
    #allocation10 [shape = 'u8[28672]{0}', space=vmem, size = 0x7000, scoped, tag = 'output window, operand 0, single buffered']
    %10 = vsyncpa [#allocation3], 0
    %11 = vsyncpa [#allocation6], 0
    %12 = vsyncpa [#allocation9], 0
    %13 = vsyncpa [#allocation4], 0
    // Predicated region
    $region2: #{tpu_custom_call.1} parent=1 // pred_check
      _
    $region3: #{tpu_custom_call.1} parent=1 // pred_check_branch
      %15 = sbr.rel (0) target = $region5
    $region4: #{tpu_custom_call.1} parent=1 // pred_region
      %s17 = ssub.s32 128, 128
      %18 = vsyncadd [#allocation3], %s17
      %s20 = sshll.u32 [#allocation2], 4
      %s21 = int_to_ptr.vmem [resolvable:$true] %s20
      %23 = dma.hbm_to_vmem [thread:$0]  %s0, 128, %s21, [#allocation3]
    $region5: #{tpu_custom_call.1} parent=1 // pred_fallthru
      _
    // Predicated region
    $region6: #{tpu_custom_call.1} parent=1 // pred_check
      _
    $region7: #{tpu_custom_call.1} parent=1 // pred_check_branch
      %25 = sbr.rel (0) target = $region9
    $region8: #{tpu_custom_call.1} parent=1 // pred_region
      %s27 = ssub.s32 128, 128
      %28 = vsyncadd [#allocation6], %s27
      %s29 = sshll.u32 [#allocation5], 4
      %s30 = int_to_ptr.vmem [resolvable:$true] %s29
      %35 = dma.hbm_to_vmem [thread:$0]  %s1, 128, %s30, [#allocation6], 64, 64, 4
    $region9: #{tpu_custom_call.1} parent=1 // pred_fallthru
      _
    // Predicated region
    $region10: #{tpu_custom_call.1} parent=1 // pred_check
      _
    $region11: #{tpu_custom_call.1} parent=1 // pred_check_branch
      %37 = sbr.rel (0) target = $region13
    $region12: #{tpu_custom_call.1} parent=1 // pred_region
      %s39 = ssub.s32 16, 16
      %40 = vsyncadd [#allocation6], %s39
      %s42 = sshll.u32 [#allocation7], 4
      %s43 = int_to_ptr.vmem [resolvable:$true] %s42
      %45 = dma.hbm_to_vmem [thread:$0]  %s2, 16, %s43, [#allocation6]
    $region13: #{tpu_custom_call.1} parent=1 // pred_fallthru
      _
    // Predicated region
    $region14: #{tpu_custom_call.1} parent=1 // pred_check
      _
    $region15: #{tpu_custom_call.1} parent=1 // pred_check_branch
      %47 = sbr.rel (0) target = $region17
    $region16: #{tpu_custom_call.1} parent=1 // pred_region
      %s49 = ssub.s32 7168, 7168
      %50 = vsyncadd [#allocation9], %s49
      %s51 = sshll.u32 [#allocation8], 4
      %s52 = int_to_ptr.vmem [resolvable:$true] %s51
      %57 = dma.hbm_to_vmem [thread:$0]  %s3, 7168, %s52, [#allocation9], 448, 448, 28
    $region17: #{tpu_custom_call.1} parent=1 // pred_fallthru
      _
    // Predicated region
    $region18: #{tpu_custom_call.1} parent=1 // pred_check
      _
    $region19: #{tpu_custom_call.1} parent=1 // pred_check_branch
      %59 = sbr.rel (0) target = $region21
    $region20: #{tpu_custom_call.1} parent=1 // pred_region
      _
    $region21: #{tpu_custom_call.1} parent=1 // pred_fallthru
      _
    // Predicated region
    $region22: #{tpu_custom_call.1} parent=1 // pred_check
      _
    $region23: #{tpu_custom_call.1} parent=1 // pred_check_branch
      %61 = sbr.rel (0) target = $region25
    $region24: #{tpu_custom_call.1} parent=1 // pred_region
      %62 = dma.done [#allocation3], 128
    $region25: #{tpu_custom_call.1} parent=1 // pred_fallthru
      _
    // Predicated region
    $region26: #{tpu_custom_call.1} parent=1 // pred_check
      _
    $region27: #{tpu_custom_call.1} parent=1 // pred_check_branch
      %64 = sbr.rel (0) target = $region29
    $region28: #{tpu_custom_call.1} parent=1 // pred_region
      %65 = dma.done [#allocation6], 128
    $region29: #{tpu_custom_call.1} parent=1 // pred_fallthru
      _
    // Predicated region
    $region30: #{tpu_custom_call.1} parent=1 // pred_check
      _
    $region31: #{tpu_custom_call.1} parent=1 // pred_check_branch
      %67 = sbr.rel (0) target = $region33
    $region32: #{tpu_custom_call.1} parent=1 // pred_region
      %68 = dma.done [#allocation6], 16
    $region33: #{tpu_custom_call.1} parent=1 // pred_fallthru
      _
    // Predicated region
    $region34: #{tpu_custom_call.1} parent=1 // pred_check
      _
    $region35: #{tpu_custom_call.1} parent=1 // pred_check_branch
      %70 = sbr.rel (0) target = $region37
    $region36: #{tpu_custom_call.1} parent=1 // pred_region
      %71 = dma.done [#allocation9], 7168
    $region37: #{tpu_custom_call.1} parent=1 // pred_fallthru
      _
    %v72 = vld [vmem:[#allocation2] sm:$0xff]
    %v73 = vld [vmem:[#allocation5] sm:$0xf]
    %v74 = vld [vmem:[#allocation5 + $0x4] sm:$0xf]
    %v75 = vunpack.c.l.bf16 %v73
    %v76 = vunpack.c.l.bf16 %v74
    %v77 = vld [vmem:[#allocation7] sm:$0x1]
    %v79 = vlaneseq
    %v80 = vshrl.u32 %v79, 7
    %v81 = vsub.s32 0, %v80
    %v82 = vrot.slane %v77, %v81
    %vm84 = vcmask 130048
    %v86 = vsel %vm84, %v72, 0
    %88 = vmatprep.subr.mxu0 0.0
    %89 = vmatpush1.msra.mxu0 0.0
    %90 = vmatprep.subr.mxu0 0.0
    %91 = vmatpush1.msra.mxu0 0.0
    %92 = vmatprep.subr.mxu0 0.0
    %93 = vmatpush1.msra.mxu0 0.0
    %94 = vmatprep.subr.mxu0 0.0
    %95 = vmatpush1.msra.mxu0 0.0
    %96 = vmatprep.subr.mxu0 0.0
    %97 = vmatpush1.msra.mxu0 0.0
    %98 = vmatprep.subr.mxu0 0.0
    %99 = vmatpush1.msra.mxu0 0.0
    %100 = vmatprep.subr.mxu0 0.0
    %101 = vmatpush1.msra.mxu0 0.0
    %102 = vmatprep.subr.mxu0 0.0
    %103 = vmatpush1.msra.mxu0 0.0
    %104 = vmatprep.subr.mxu0 0.0
    %105 = vmatpush1.msra.mxu0 0.0
    %106 = vmatprep.subr.mxu0 0.0
    %107 = vmatpush1.msra.mxu0 0.0
    %108 = vmatprep.subr.mxu0 0.0
    %109 = vmatpush1.msra.mxu0 0.0
    %110 = vmatprep.subr.mxu0 0.0
    %111 = vmatpush1.msra.mxu0 0.0
    %112 = vmatprep.subr.mxu0 0.0
    %113 = vmatpush1.msra.mxu0 0.0
    %114 = vmatprep.subr.mxu0 0.0
    %115 = vmatpush1.msra.mxu0 0.0
    %116 = vmatprep.subr.mxu0 0.0
    %117 = vmatpush1.msra.mxu0 %v76
    %118 = vmatprep.subr.mxu0 0.0
    %119 = vmatpush1.msra.mxu0 %v75
    %120 = vmatprep.subr.mxu0 0.0
    %121 = vmatpush2.msra.mxu0 0.0
    %122 = vmatprep.subr.mxu0 0.0
    %123 = vmatpush2.msra.mxu0 0.0
    %124 = vmatprep.subr.mxu0 0.0
    %125 = vmatpush2.msra.mxu0 0.0
    %126 = vmatprep.subr.mxu0 0.0
    %127 = vmatpush2.msra.mxu0 0.0
    %128 = vmatprep.subr.mxu0 0.0
    %129 = vmatpush2.msra.mxu0 0.0
    %130 = vmatprep.subr.mxu0 0.0
    %131 = vmatpush2.msra.mxu0 0.0
    %132 = vmatprep.subr.mxu0 0.0
    %133 = vmatpush2.msra.mxu0 0.0
    %134 = vmatprep.subr.mxu0 0.0
    %135 = vmatpush2.msra.mxu0 0.0
    %136 = vmatprep.subr.mxu0 0.0
    %137 = vmatpush2.msra.mxu0 0.0
    %138 = vmatprep.subr.mxu0 0.0
    %139 = vmatpush2.msra.mxu0 0.0
    %140 = vmatprep.subr.mxu0 0.0
    %141 = vmatpush2.msra.mxu0 0.0
    %142 = vmatprep.subr.mxu0 0.0
    %143 = vmatpush2.msra.mxu0 0.0
    %144 = vmatprep.subr.mxu0 0.0
    %145 = vmatpush2.msra.mxu0 0.0
    %146 = vmatprep.subr.mxu0 0.0
    %147 = vmatpush2.msra.mxu0 0.0
    %148 = vmatprep.subr.mxu0 0.0
    %149 = vmatpush2.msra.mxu0 0.0
    %150 = vmatprep.subr.mxu0 0.0
    %151 = vmatpush2.msra.mxu0 0.0
    %152 = vmatprep.mubr.f32.mxu0 0.0
    %153 = vmatmul.mubr.f32.gmra.mxu0 %v86
    %v154 = vpop.f32.mrf.mxu0
    %v155 = vadd.f32 %v82, %v154
    %v156 = vpop.f32.mrf.mxu0
    %157 = vdwg.mxu0
    %v158 = vmax.f32 %v155, 0.0
    %v159 = vld [vmem:[#allocation8] sm:$0xff]
    %v160 = vld [vmem:[#allocation8 + $0x8] sm:$0xff]
    %v161 = vld [vmem:[#allocation8 + $0x10] sm:$0xff]
    %v162 = vld [vmem:[#allocation8 + $0x18] sm:$0xf]
    %v163 = vld [vmem:[#allocation8 + $0x1c] sm:$0xff]
    %v164 = vld [vmem:[#allocation8 + $0x24] sm:$0xff]
    %v165 = vld [vmem:[#allocation8 + $0x2c] sm:$0xff]
    %v166 = vld [vmem:[#allocation8 + $0x34] sm:$0xf]
    %v167 = vld [vmem:[#allocation8 + $0x38] sm:$0xff]
    %v168 = vld [vmem:[#allocation8 + $0x40] sm:$0xff]
    %v169 = vld [vmem:[#allocation8 + $0x48] sm:$0xff]
    %v170 = vld [vmem:[#allocation8 + $0x50] sm:$0xf]
    %v171 = vld [vmem:[#allocation8 + $0x54] sm:$0xff]
    %v172 = vld [vmem:[#allocation8 + $0x5c] sm:$0xff]
    %v173 = vld [vmem:[#allocation8 + $0x64] sm:$0xff]
    %v174 = vld [vmem:[#allocation8 + $0x6c] sm:$0xf]
    %v175 = vld [vmem:[#allocation8 + $0x70] sm:$0xff]
    %v176 = vld [vmem:[#allocation8 + $0x78] sm:$0xff]
    %v177 = vld [vmem:[#allocation8 + $0x80] sm:$0xff]
    %v178 = vld [vmem:[#allocation8 + $0x88] sm:$0xf]
    %v179 = vld [vmem:[#allocation8 + $0x8c] sm:$0xff]
    %v180 = vld [vmem:[#allocation8 + $0x94] sm:$0xff]
    %v181 = vld [vmem:[#allocation8 + $0x9c] sm:$0xff]
    %v182 = vld [vmem:[#allocation8 + $0xa4] sm:$0xf]
    %v183 = vld [vmem:[#allocation8 + $0xa8] sm:$0xff]
    %v184 = vld [vmem:[#allocation8 + $0xb0] sm:$0xff]
    %v185 = vld [vmem:[#allocation8 + $0xb8] sm:$0xff]
    %v186 = vld [vmem:[#allocation8 + $0xc0] sm:$0xf]
    %v187 = vld [vmem:[#allocation8 + $0xc4] sm:$0xff]
    %v188 = vld [vmem:[#allocation8 + $0xcc] sm:$0xff]
    %v189 = vld [vmem:[#allocation8 + $0xd4] sm:$0xff]
    %v190 = vld [vmem:[#allocation8 + $0xdc] sm:$0xf]
    %v191 = vld [vmem:[#allocation8 + $0xe0] sm:$0xff]
    %v192 = vld [vmem:[#allocation8 + $0xe8] sm:$0xff]
    %v193 = vld [vmem:[#allocation8 + $0xf0] sm:$0xff]
    %v194 = vld [vmem:[#allocation8 + $0xf8] sm:$0xf]
    %v195 = vld [vmem:[#allocation8 + $0xfc] sm:$0xff]
    %v196 = vld [vmem:[#allocation8 + $0x104] sm:$0xff]
    %v197 = vld [vmem:[#allocation8 + $0x10c] sm:$0xff]
    %v198 = vld [vmem:[#allocation8 + $0x114] sm:$0xf]
    %v199 = vld [vmem:[#allocation8 + $0x118] sm:$0xff]
    %v200 = vld [vmem:[#allocation8 + $0x120] sm:$0xff]
    %v201 = vld [vmem:[#allocation8 + $0x128] sm:$0xff]
    %v202 = vld [vmem:[#allocation8 + $0x130] sm:$0xf]
    %v203 = vld [vmem:[#allocation8 + $0x134] sm:$0xff]
    %v204 = vld [vmem:[#allocation8 + $0x13c] sm:$0xff]
    %v205 = vld [vmem:[#allocation8 + $0x144] sm:$0xff]
    %v206 = vld [vmem:[#allocation8 + $0x14c] sm:$0xf]
    %v207 = vld [vmem:[#allocation8 + $0x150] sm:$0xff]
    %v208 = vld [vmem:[#allocation8 + $0x158] sm:$0xff]
    %v209 = vld [vmem:[#allocation8 + $0x160] sm:$0xff]
    %v210 = vld [vmem:[#allocation8 + $0x168] sm:$0xf]
    %v211 = vld [vmem:[#allocation8 + $0x16c] sm:$0xff]
    %v212 = vld [vmem:[#allocation8 + $0x174] sm:$0xff]
    %v213 = vld [vmem:[#allocation8 + $0x17c] sm:$0xff]
    %v214 = vld [vmem:[#allocation8 + $0x184] sm:$0xf]
    %v215 = vld [vmem:[#allocation8 + $0x188] sm:$0xff]
    %v216 = vld [vmem:[#allocation8 + $0x190] sm:$0xff]
    %v217 = vld [vmem:[#allocation8 + $0x198] sm:$0xff]
    %v218 = vld [vmem:[#allocation8 + $0x1a0] sm:$0xf]
    %v219 = vld [vmem:[#allocation8 + $0x1a4] sm:$0xff]
    %v220 = vld [vmem:[#allocation8 + $0x1ac] sm:$0xff]
    %v221 = vld [vmem:[#allocation8 + $0x1b4] sm:$0xff]
    %v222 = vld [vmem:[#allocation8 + $0x1bc] sm:$0xf]
    %v223 = vunpack.c.l.bf16 %v159
    %v224 = vunpack.c.h.bf16 %v159
    %v225 = vunpack.c.l.bf16 %v160
    %v226 = vunpack.c.h.bf16 %v160
    %v227 = vunpack.c.l.bf16 %v161
    %v228 = vunpack.c.h.bf16 %v161
    %v229 = vunpack.c.l.bf16 %v162
    %v230 = vunpack.c.l.bf16 %v163
    %v231 = vunpack.c.h.bf16 %v163
    %v232 = vunpack.c.l.bf16 %v164
    %v233 = vunpack.c.h.bf16 %v164
    %v234 = vunpack.c.l.bf16 %v165
    %v235 = vunpack.c.h.bf16 %v165
    %v236 = vunpack.c.l.bf16 %v166
    %v237 = vunpack.c.l.bf16 %v167
    %v238 = vunpack.c.h.bf16 %v167
    %v239 = vunpack.c.l.bf16 %v168
    %v240 = vunpack.c.h.bf16 %v168
    %v241 = vunpack.c.l.bf16 %v169
    %v242 = vunpack.c.h.bf16 %v169
    %v243 = vunpack.c.l.bf16 %v170
    %v244 = vunpack.c.l.bf16 %v171
    %v245 = vunpack.c.h.bf16 %v171
    %v246 = vunpack.c.l.bf16 %v172
    %v247 = vunpack.c.h.bf16 %v172
    %v248 = vunpack.c.l.bf16 %v173
    %v249 = vunpack.c.h.bf16 %v173
    %v250 = vunpack.c.l.bf16 %v174
    %v251 = vunpack.c.l.bf16 %v175
    %v252 = vunpack.c.h.bf16 %v175
    %v253 = vunpack.c.l.bf16 %v176
    %v254 = vunpack.c.h.bf16 %v176
    %v255 = vunpack.c.l.bf16 %v177
    %v256 = vunpack.c.h.bf16 %v177
    %v257 = vunpack.c.l.bf16 %v178
    %v258 = vunpack.c.l.bf16 %v179
    %v259 = vunpack.c.h.bf16 %v179
    %v260 = vunpack.c.l.bf16 %v180
    %v261 = vunpack.c.h.bf16 %v180
    %v262 = vunpack.c.l.bf16 %v181
    %v263 = vunpack.c.h.bf16 %v181
    %v264 = vunpack.c.l.bf16 %v182
    %v265 = vunpack.c.l.bf16 %v183
    %v266 = vunpack.c.h.bf16 %v183
    %v267 = vunpack.c.l.bf16 %v184
    %v268 = vunpack.c.h.bf16 %v184
    %v269 = vunpack.c.l.bf16 %v185
    %v270 = vunpack.c.h.bf16 %v185
    %v271 = vunpack.c.l.bf16 %v186
    %v272 = vunpack.c.l.bf16 %v187
    %v273 = vunpack.c.h.bf16 %v187
    %v274 = vunpack.c.l.bf16 %v188
    %v275 = vunpack.c.h.bf16 %v188
    %v276 = vunpack.c.l.bf16 %v189
    %v277 = vunpack.c.h.bf16 %v189
    %v278 = vunpack.c.l.bf16 %v190
    %v279 = vunpack.c.l.bf16 %v191
    %v280 = vunpack.c.h.bf16 %v191
    %v281 = vunpack.c.l.bf16 %v192
    %v282 = vunpack.c.h.bf16 %v192
    %v283 = vunpack.c.l.bf16 %v193
    %v284 = vunpack.c.h.bf16 %v193
    %v285 = vunpack.c.l.bf16 %v194
    %v286 = vunpack.c.l.bf16 %v195
    %v287 = vunpack.c.h.bf16 %v195
    %v288 = vunpack.c.l.bf16 %v196
    %v289 = vunpack.c.h.bf16 %v196
    %v290 = vunpack.c.l.bf16 %v197
    %v291 = vunpack.c.h.bf16 %v197
    %v292 = vunpack.c.l.bf16 %v198
    %v293 = vunpack.c.l.bf16 %v199
    %v294 = vunpack.c.h.bf16 %v199
    %v295 = vunpack.c.l.bf16 %v200
    %v296 = vunpack.c.h.bf16 %v200
    %v297 = vunpack.c.l.bf16 %v201
    %v298 = vunpack.c.h.bf16 %v201
    %v299 = vunpack.c.l.bf16 %v202
    %v300 = vunpack.c.l.bf16 %v203
    %v301 = vunpack.c.h.bf16 %v203
    %v302 = vunpack.c.l.bf16 %v204
    %v303 = vunpack.c.h.bf16 %v204
    %v304 = vunpack.c.l.bf16 %v205
    %v305 = vunpack.c.h.bf16 %v205
    %v306 = vunpack.c.l.bf16 %v206
    %v307 = vunpack.c.l.bf16 %v207
    %v308 = vunpack.c.h.bf16 %v207
    %v309 = vunpack.c.l.bf16 %v208
    %v310 = vunpack.c.h.bf16 %v208
    %v311 = vunpack.c.l.bf16 %v209
    %v312 = vunpack.c.h.bf16 %v209
    %v313 = vunpack.c.l.bf16 %v210
    %v314 = vunpack.c.l.bf16 %v211
    %v315 = vunpack.c.h.bf16 %v211
    %v316 = vunpack.c.l.bf16 %v212
    %v317 = vunpack.c.h.bf16 %v212
    %v318 = vunpack.c.l.bf16 %v213
    %v319 = vunpack.c.h.bf16 %v213
    %v320 = vunpack.c.l.bf16 %v214
    %v321 = vunpack.c.l.bf16 %v215
    %v322 = vunpack.c.h.bf16 %v215
    %v323 = vunpack.c.l.bf16 %v216
    %v324 = vunpack.c.h.bf16 %v216
    %v325 = vunpack.c.l.bf16 %v217
    %v326 = vunpack.c.h.bf16 %v217
    %v327 = vunpack.c.l.bf16 %v218
    %v328 = vunpack.c.l.bf16 %v219
    %v329 = vunpack.c.h.bf16 %v219
    %v330 = vunpack.c.l.bf16 %v220
    %v331 = vunpack.c.h.bf16 %v220
    %v332 = vunpack.c.l.bf16 %v221
    %v333 = vunpack.c.h.bf16 %v221
    %v334 = vunpack.c.l.bf16 %v222
    %v335 = vld [vmem:[%s4] sm:$0xff]
    %v337 = vlaneseq
    %v338 = vshrl.u32 %v337, 7
    %v339 = vsub.s32 0, %v338
    %v340 = vrot.slane %v335, %v339
    %v341 = vlaneseq
    %v342 = vshrl.u32 %v341, 7
    %v343 = vsub.s32 1, %v342
    %v344 = vrot.slane %v335, %v343
    %v345 = vlaneseq
    %v346 = vshrl.u32 %v345, 7
    %v347 = vsub.s32 2, %v346
    %v348 = vrot.slane %v335, %v347
    %v349 = vlaneseq
    %v350 = vshrl.u32 %v349, 7
    %v351 = vsub.s32 3, %v350
    %v352 = vrot.slane %v335, %v351
    %v353 = vlaneseq
    %v354 = vshrl.u32 %v353, 7
    %v355 = vsub.s32 4, %v354
    %v356 = vrot.slane %v335, %v355
    %v357 = vlaneseq
    %v358 = vshrl.u32 %v357, 7
    %v359 = vsub.s32 5, %v358
    %v360 = vrot.slane %v335, %v359
    %v361 = vlaneseq
    %v362 = vshrl.u32 %v361, 7
    %v363 = vsub.s32 6, %v362
    %v364 = vrot.slane %v335, %v363
    %372 = vmatprep.subr.mxu0 %v329
    %373 = vmatpush1.msra.mxu0 %v328
    %374 = vmatprep.subr.mxu0 %v322
    %375 = vmatpush1.msra.mxu0 %v321
    %376 = vmatprep.subr.mxu0 %v315
    %377 = vmatpush1.msra.mxu0 %v314
    %378 = vmatprep.subr.mxu0 %v308
    %379 = vmatpush1.msra.mxu0 %v307
    %380 = vmatprep.subr.mxu0 %v301
    %381 = vmatpush1.msra.mxu0 %v300
    %382 = vmatprep.subr.mxu0 %v294
    %383 = vmatpush1.msra.mxu0 %v293
    %384 = vmatprep.subr.mxu0 %v287
    %385 = vmatpush1.msra.mxu0 %v286
    %386 = vmatprep.subr.mxu0 %v280
    %387 = vmatpush1.msra.mxu0 %v279
    %388 = vmatprep.subr.mxu0 %v273
    %389 = vmatpush1.msra.mxu0 %v272
    %390 = vmatprep.subr.mxu0 %v266
    %391 = vmatpush1.msra.mxu0 %v265
    %392 = vmatprep.subr.mxu0 %v259
    %393 = vmatpush1.msra.mxu0 %v258
    %394 = vmatprep.subr.mxu0 %v252
    %395 = vmatpush1.msra.mxu0 %v251
    %396 = vmatprep.subr.mxu0 %v245
    %397 = vmatpush1.msra.mxu0 %v244
    %398 = vmatprep.subr.mxu0 %v238
    %399 = vmatpush1.msra.mxu0 %v237
    %400 = vmatprep.subr.mxu0 %v231
    %401 = vmatpush1.msra.mxu0 %v230
    %402 = vmatprep.subr.mxu0 %v224
    %403 = vmatpush1.msra.mxu0 %v223
    %404 = vmatprep.subr.mxu0 0.0
    %405 = vmatpush2.msra.mxu0 0.0
    %406 = vmatprep.subr.mxu0 0.0
    %407 = vmatpush2.msra.mxu0 0.0
    %408 = vmatprep.subr.mxu0 0.0
    %409 = vmatpush2.msra.mxu0 0.0
    %410 = vmatprep.subr.mxu0 0.0
    %411 = vmatpush2.msra.mxu0 0.0
    %412 = vmatprep.subr.mxu0 0.0
    %413 = vmatpush2.msra.mxu0 0.0
    %414 = vmatprep.subr.mxu0 0.0
    %415 = vmatpush2.msra.mxu0 0.0
    %416 = vmatprep.subr.mxu0 0.0
    %417 = vmatpush2.msra.mxu0 0.0
    %418 = vmatprep.subr.mxu0 0.0
    %419 = vmatpush2.msra.mxu0 0.0
    %420 = vmatprep.subr.mxu0 0.0
    %421 = vmatpush2.msra.mxu0 0.0
    %422 = vmatprep.subr.mxu0 0.0
    %423 = vmatpush2.msra.mxu0 0.0
    %424 = vmatprep.subr.mxu0 0.0
    %425 = vmatpush2.msra.mxu0 0.0
    %426 = vmatprep.subr.mxu0 0.0
    %427 = vmatpush2.msra.mxu0 0.0
    %428 = vmatprep.subr.mxu0 0.0
    %429 = vmatpush2.msra.mxu0 0.0
    %430 = vmatprep.subr.mxu0 0.0
    %431 = vmatpush2.msra.mxu0 0.0
    %432 = vmatprep.subr.mxu0 0.0
    %433 = vmatpush2.msra.mxu0 0.0
    %434 = vmatprep.subr.mxu0 0.0
    %435 = vmatpush2.msra.mxu0 0.0
    %436 = vmatprep.mubr.f32.mxu0 0.0
    %437 = vmatmul.mubr.f32.gmra.mxu0 %v158
    %v438 = vpop.f32.mrf.mxu0
    %v439 = vadd.f32 %v340, %v438
    %v440 = vpop.f32.mrf.mxu0
    %v441 = vadd.f32 %v344, %v440
    %442 = vdwg.mxu0
    %443 = vmatprep.subr.mxu0 %v331
    %444 = vmatpush1.msra.mxu0 %v330
    %445 = vmatprep.subr.mxu0 %v324
    %446 = vmatpush1.msra.mxu0 %v323
    %447 = vmatprep.subr.mxu0 %v317
    %448 = vmatpush1.msra.mxu0 %v316
    %449 = vmatprep.subr.mxu0 %v310
    %450 = vmatpush1.msra.mxu0 %v309
    %451 = vmatprep.subr.mxu0 %v303
    %452 = vmatpush1.msra.mxu0 %v302
    %453 = vmatprep.subr.mxu0 %v296
    %454 = vmatpush1.msra.mxu0 %v295
    %455 = vmatprep.subr.mxu0 %v289
    %456 = vmatpush1.msra.mxu0 %v288
    %457 = vmatprep.subr.mxu0 %v282
    %458 = vmatpush1.msra.mxu0 %v281
    %459 = vmatprep.subr.mxu0 %v275
    %460 = vmatpush1.msra.mxu0 %v274
    %461 = vmatprep.subr.mxu0 %v268
    %462 = vmatpush1.msra.mxu0 %v267
    %463 = vmatprep.subr.mxu0 %v261
    %464 = vmatpush1.msra.mxu0 %v260
    %465 = vmatprep.subr.mxu0 %v254
    %466 = vmatpush1.msra.mxu0 %v253
    %467 = vmatprep.subr.mxu0 %v247
    %468 = vmatpush1.msra.mxu0 %v246
    %469 = vmatprep.subr.mxu0 %v240
    %470 = vmatpush1.msra.mxu0 %v239
    %471 = vmatprep.subr.mxu0 %v233
    %472 = vmatpush1.msra.mxu0 %v232
    %473 = vmatprep.subr.mxu0 %v226
    %474 = vmatpush1.msra.mxu0 %v225
    %475 = vmatprep.subr.mxu0 0.0
    %476 = vmatpush2.msra.mxu0 0.0
    %477 = vmatprep.subr.mxu0 0.0
    %478 = vmatpush2.msra.mxu0 0.0
    %479 = vmatprep.subr.mxu0 0.0
    %480 = vmatpush2.msra.mxu0 0.0
    %481 = vmatprep.subr.mxu0 0.0
    %482 = vmatpush2.msra.mxu0 0.0
    %483 = vmatprep.subr.mxu0 0.0
    %484 = vmatpush2.msra.mxu0 0.0
    %485 = vmatprep.subr.mxu0 0.0
    %486 = vmatpush2.msra.mxu0 0.0
    %487 = vmatprep.subr.mxu0 0.0
    %488 = vmatpush2.msra.mxu0 0.0
    %489 = vmatprep.subr.mxu0 0.0
    %490 = vmatpush2.msra.mxu0 0.0
    %491 = vmatprep.subr.mxu0 0.0
    %492 = vmatpush2.msra.mxu0 0.0
    %493 = vmatprep.subr.mxu0 0.0
    %494 = vmatpush2.msra.mxu0 0.0
    %495 = vmatprep.subr.mxu0 0.0
    %496 = vmatpush2.msra.mxu0 0.0
    %497 = vmatprep.subr.mxu0 0.0
    %498 = vmatpush2.msra.mxu0 0.0
    %499 = vmatprep.subr.mxu0 0.0
    %500 = vmatpush2.msra.mxu0 0.0
    %501 = vmatprep.subr.mxu0 0.0
    %502 = vmatpush2.msra.mxu0 0.0
    %503 = vmatprep.subr.mxu0 0.0
    %504 = vmatpush2.msra.mxu0 0.0
    %505 = vmatprep.subr.mxu0 0.0
    %506 = vmatpush2.msra.mxu0 0.0
    %507 = vmatprep.mubr.f32.mxu0 0.0
    %508 = vmatmul.mubr.f32.gmra.mxu0 %v158
    %v509 = vpop.f32.mrf.mxu0
    %v510 = vadd.f32 %v348, %v509
    %v511 = vpop.f32.mrf.mxu0
    %v512 = vadd.f32 %v352, %v511
    %513 = vdwg.mxu0
    %514 = vmatprep.subr.mxu0 %v333
    %515 = vmatpush1.msra.mxu0 %v332
    %516 = vmatprep.subr.mxu0 %v326
    %517 = vmatpush1.msra.mxu0 %v325
    %518 = vmatprep.subr.mxu0 %v319
    %519 = vmatpush1.msra.mxu0 %v318
    %520 = vmatprep.subr.mxu0 %v312
    %521 = vmatpush1.msra.mxu0 %v311
    %522 = vmatprep.subr.mxu0 %v305
    %523 = vmatpush1.msra.mxu0 %v304
    %524 = vmatprep.subr.mxu0 %v298
    %525 = vmatpush1.msra.mxu0 %v297
    %526 = vmatprep.subr.mxu0 %v291
    %527 = vmatpush1.msra.mxu0 %v290
    %528 = vmatprep.subr.mxu0 %v284
    %529 = vmatpush1.msra.mxu0 %v283
    %530 = vmatprep.subr.mxu0 %v277
    %531 = vmatpush1.msra.mxu0 %v276
    %532 = vmatprep.subr.mxu0 %v270
    %533 = vmatpush1.msra.mxu0 %v269
    %534 = vmatprep.subr.mxu0 %v263
    %535 = vmatpush1.msra.mxu0 %v262
    %536 = vmatprep.subr.mxu0 %v256
    %537 = vmatpush1.msra.mxu0 %v255
    %538 = vmatprep.subr.mxu0 %v249
    %539 = vmatpush1.msra.mxu0 %v248
    %540 = vmatprep.subr.mxu0 %v242
    %541 = vmatpush1.msra.mxu0 %v241
    %542 = vmatprep.subr.mxu0 %v235
    %543 = vmatpush1.msra.mxu0 %v234
    %544 = vmatprep.subr.mxu0 %v228
    %545 = vmatpush1.msra.mxu0 %v227
    %546 = vmatprep.subr.mxu0 0.0
    %547 = vmatpush2.msra.mxu0 0.0
    %548 = vmatprep.subr.mxu0 0.0
    %549 = vmatpush2.msra.mxu0 0.0
    %550 = vmatprep.subr.mxu0 0.0
    %551 = vmatpush2.msra.mxu0 0.0
    %552 = vmatprep.subr.mxu0 0.0
    %553 = vmatpush2.msra.mxu0 0.0
    %554 = vmatprep.subr.mxu0 0.0
    %555 = vmatpush2.msra.mxu0 0.0
    %556 = vmatprep.subr.mxu0 0.0
    %557 = vmatpush2.msra.mxu0 0.0
    %558 = vmatprep.subr.mxu0 0.0
    %559 = vmatpush2.msra.mxu0 0.0
    %560 = vmatprep.subr.mxu0 0.0
    %561 = vmatpush2.msra.mxu0 0.0
    %562 = vmatprep.subr.mxu0 0.0
    %563 = vmatpush2.msra.mxu0 0.0
    %564 = vmatprep.subr.mxu0 0.0
    %565 = vmatpush2.msra.mxu0 0.0
    %566 = vmatprep.subr.mxu0 0.0
    %567 = vmatpush2.msra.mxu0 0.0
    %568 = vmatprep.subr.mxu0 0.0
    %569 = vmatpush2.msra.mxu0 0.0
    %570 = vmatprep.subr.mxu0 0.0
    %571 = vmatpush2.msra.mxu0 0.0
    %572 = vmatprep.subr.mxu0 0.0
    %573 = vmatpush2.msra.mxu0 0.0
    %574 = vmatprep.subr.mxu0 0.0
    %575 = vmatpush2.msra.mxu0 0.0
    %576 = vmatprep.subr.mxu0 0.0
    %577 = vmatpush2.msra.mxu0 0.0
    %578 = vmatprep.mubr.f32.mxu0 0.0
    %579 = vmatmul.mubr.f32.gmra.mxu0 %v158
    %v580 = vpop.f32.mrf.mxu0
    %v581 = vadd.f32 %v356, %v580
    %v582 = vpop.f32.mrf.mxu0
    %v583 = vadd.f32 %v360, %v582
    %584 = vdwg.mxu0
    %585 = vmatprep.subr.mxu0 0.0
    %586 = vmatpush1.msra.mxu0 %v334
    %587 = vmatprep.subr.mxu0 0.0
    %588 = vmatpush1.msra.mxu0 %v327
    %589 = vmatprep.subr.mxu0 0.0
    %590 = vmatpush1.msra.mxu0 %v320
    %591 = vmatprep.subr.mxu0 0.0
    %592 = vmatpush1.msra.mxu0 %v313
    %593 = vmatprep.subr.mxu0 0.0
    %594 = vmatpush1.msra.mxu0 %v306
    %595 = vmatprep.subr.mxu0 0.0
    %596 = vmatpush1.msra.mxu0 %v299
    %597 = vmatprep.subr.mxu0 0.0
    %598 = vmatpush1.msra.mxu0 %v292
    %599 = vmatprep.subr.mxu0 0.0
    %600 = vmatpush1.msra.mxu0 %v285
    %601 = vmatprep.subr.mxu0 0.0
    %602 = vmatpush1.msra.mxu0 %v278
    %603 = vmatprep.subr.mxu0 0.0
    %604 = vmatpush1.msra.mxu0 %v271
    %605 = vmatprep.subr.mxu0 0.0
    %606 = vmatpush1.msra.mxu0 %v264
    %607 = vmatprep.subr.mxu0 0.0
    %608 = vmatpush1.msra.mxu0 %v257
    %609 = vmatprep.subr.mxu0 0.0
    %610 = vmatpush1.msra.mxu0 %v250
    %611 = vmatprep.subr.mxu0 0.0
    %612 = vmatpush1.msra.mxu0 %v243
    %613 = vmatprep.subr.mxu0 0.0
    %614 = vmatpush1.msra.mxu0 %v236
    %615 = vmatprep.subr.mxu0 0.0
    %616 = vmatpush1.msra.mxu0 %v229
    %617 = vmatprep.subr.mxu0 0.0
    %618 = vmatpush2.msra.mxu0 0.0
    %619 = vmatprep.subr.mxu0 0.0
    %620 = vmatpush2.msra.mxu0 0.0
    %621 = vmatprep.subr.mxu0 0.0
    %622 = vmatpush2.msra.mxu0 0.0
    %623 = vmatprep.subr.mxu0 0.0
    %624 = vmatpush2.msra.mxu0 0.0
    %625 = vmatprep.subr.mxu0 0.0
    %626 = vmatpush2.msra.mxu0 0.0
    %627 = vmatprep.subr.mxu0 0.0
    %628 = vmatpush2.msra.mxu0 0.0
    %629 = vmatprep.subr.mxu0 0.0
    %630 = vmatpush2.msra.mxu0 0.0
    %631 = vmatprep.subr.mxu0 0.0
    %632 = vmatpush2.msra.mxu0 0.0
    %633 = vmatprep.subr.mxu0 0.0
    %634 = vmatpush2.msra.mxu0 0.0
    %635 = vmatprep.subr.mxu0 0.0
    %636 = vmatpush2.msra.mxu0 0.0
    %637 = vmatprep.subr.mxu0 0.0
    %638 = vmatpush2.msra.mxu0 0.0
    %639 = vmatprep.subr.mxu0 0.0
    %640 = vmatpush2.msra.mxu0 0.0
    %641 = vmatprep.subr.mxu0 0.0
    %642 = vmatpush2.msra.mxu0 0.0
    %643 = vmatprep.subr.mxu0 0.0
    %644 = vmatpush2.msra.mxu0 0.0
    %645 = vmatprep.subr.mxu0 0.0
    %646 = vmatpush2.msra.mxu0 0.0
    %647 = vmatprep.subr.mxu0 0.0
    %648 = vmatpush2.msra.mxu0 0.0
    %649 = vmatprep.mubr.f32.mxu0 0.0
    %650 = vmatmul.mubr.f32.gmra.mxu0 %v158
    %v651 = vpop.f32.mrf.mxu0
    %v652 = vadd.f32 %v364, %v651
    %v653 = vpop.f32.mrf.mxu0
    %654 = vdwg.mxu0
    %v655 = vxor.u32 %v439, 2147483648
    %v656 = vxor.u32 %v441, 2147483648
    %v657 = vxor.u32 %v510, 2147483648
    %v658 = vxor.u32 %v512, 2147483648
    %v659 = vxor.u32 %v581, 2147483648
    %v660 = vxor.u32 %v583, 2147483648
    %v661 = vxor.u32 %v652, 2147483648
    %v662 = vmul.f32 %v655, 1.442695
    %v663 = vpow.pop %v662
    %v664 = vmul.f32 %v656, 1.442695
    %v665 = vpow.pop %v664
    %v666 = vmul.f32 %v657, 1.442695
    %v667 = vpow.pop %v666
    %v668 = vmul.f32 %v658, 1.442695
    %v669 = vpow.pop %v668
    %v670 = vmul.f32 %v659, 1.442695
    %v671 = vpow.pop %v670
    %v672 = vmul.f32 %v660, 1.442695
    %v673 = vpow.pop %v672
    %v674 = vmul.f32 %v661, 1.442695
    %v675 = vpow.pop %v674
    %v676 = vadd.f32 %v663, 1.0
    %v677 = vadd.f32 %v665, 1.0
    %v678 = vadd.f32 %v667, 1.0
    %v679 = vadd.f32 %v669, 1.0
    %v680 = vadd.f32 %v671, 1.0
    %v681 = vadd.f32 %v673, 1.0
    %v682 = vadd.f32 %v675, 1.0
    %v683 = vrcp.pop %v676
    %v684 = vmul.f32 1.0, %v683
    %v685 = vrcp.pop %v677
    %v686 = vmul.f32 1.0, %v685
    %v687 = vrcp.pop %v678
    %v688 = vmul.f32 1.0, %v687
    %v689 = vrcp.pop %v679
    %v690 = vmul.f32 1.0, %v689
    %v691 = vrcp.pop %v680
    %v692 = vmul.f32 1.0, %v691
    %v693 = vrcp.pop %v681
    %v694 = vmul.f32 1.0, %v693
    %v695 = vrcp.pop %v682
    %v696 = vmul.f32 1.0, %v695
    %697 = vst [vmem:[#allocation10] sm:$0xff] %v684
    %698 = vst [vmem:[#allocation10 + $0x8] sm:$0xff] %v686
    %699 = vst [vmem:[#allocation10 + $0x10] sm:$0xff] %v688
    %700 = vst [vmem:[#allocation10 + $0x18] sm:$0xff] %v690
    %701 = vst [vmem:[#allocation10 + $0x20] sm:$0xff] %v692
    %702 = vst [vmem:[#allocation10 + $0x28] sm:$0xff] %v694
    %703 = vst [vmem:[#allocation10 + $0x30] sm:$0xff] %v696
    // Predicated region
    $region38: #{tpu_custom_call.1} parent=1 // pred_check
      _
    $region39: #{tpu_custom_call.1} parent=1 // pred_check_branch
      %705 = sbr.rel (0) target = $region41
    $region40: #{tpu_custom_call.1} parent=1 // pred_region
      %s707 = ssub.s32 896, 896
      %708 = vsyncadd [#allocation4], %s707
      %s710 = sshll.u32 [#allocation10], 4
      %s711 = int_to_ptr.vmem [resolvable:$true] %s710
      %713 = dma.vmem_to_hbm [thread:$0]  %s711, 896, %s5, [#allocation4]
    $region41: #{tpu_custom_call.1} parent=1 // pred_fallthru
      _
    // Predicated region
    $region42: #{tpu_custom_call.1} parent=1 // pred_check
      _
    $region43: #{tpu_custom_call.1} parent=1 // pred_check_branch
      %715 = sbr.rel (0) target = $region45
    $region44: #{tpu_custom_call.1} parent=1 // pred_region
      %716 = dma.done [#allocation4], 896
    $region45: #{tpu_custom_call.1} parent=1 // pred_fallthru
      _
    %717 = vsyncpa [#allocation3], 1
    %718 = vsyncpa [#allocation6], 1
    %719 = vsyncpa [#allocation9], 1
    %720 = vsyncpa [#allocation4], 1

</llo_original>
